<compile_context>
chip_gen: v5e
topology: v5e:2x2
jax: 0.10.0
libtpu: 0.0.40
codegen_flags: <defaults>
</compile_context>

<pallas_src>
import math

import jax
import jax.numpy as jnp
from jax.experimental import pallas as pl
from jax.experimental.pallas import tpu as pltpu

NUM_VEC = 10  # rows of the packed bias / LayerNorm-param buffer


# ----------------------------------------------------------------------------------
# Shared arithmetic helpers (used by BOTH the kernel and the pure-JAX reference so
# the bf16-matmul convention matches).
# ----------------------------------------------------------------------------------
def _bdot(a, b, dims=None):
    a = a.astype(jnp.bfloat16)
    b = b.astype(jnp.bfloat16)
    if dims is None:
        return jnp.dot(a, b, preferred_element_type=jnp.float32)
    return jax.lax.dot_general(a, b, dims, preferred_element_type=jnp.float32)


def _layer_norm(x, gamma, beta, eps=1e-5):
    mu = jnp.mean(x, axis=-1, keepdims=True)
    xc = x - mu
    var = jnp.mean(xc * xc, axis=-1, keepdims=True)
    return xc * jax.lax.rsqrt(var + eps) * gamma + beta


# ----------------------------------------------------------------------------------
# Pallas kernel: one (Bblk, n, ...) slab of batch elements per grid step.
# ----------------------------------------------------------------------------------
def _entity_actor_kernel(emb_ref, mask_ref, gum_ref,
                         w_embed_ref, w_qkv_ref, w_post_ref, w_ff2_ref, vec_ref,
                         out_ref):
    bblk, n, in_dim = emb_ref.shape
    H = w_qkv_ref.shape[0]
    A = gum_ref.shape[2]
    M = bblk * n
    f32 = jnp.float32

    vec = vec_ref[...]                       # (NUM_VEC, 2H) f32
    wp = w_post_ref[...]                     # (H, 4H + A) bf16: [Wu | Wf1 | Wo1 | Wo2]

    x = emb_ref[...].reshape(M, in_dim)      # bf16 rows, flat over batch*entity

    # --- input_net & token_layer fused into one (M,in)@(in,2H) MXU pass ------------
    h_all = jnp.maximum(_bdot(x, w_embed_ref[...]) + vec[0:1, :], 0.0)   # (M, 2H) f32
    x1 = h_all[:, :H]                        # input_net(embs): context tokens
    h_tok = h_all[:, H:]                     # token_layer(embs): per-group token 0

    # --- merged QKV projection: one MXU call for token rows AND context rows -------
    qkv_all = _bdot(jnp.concatenate([h_tok, x1], axis=0), w_qkv_ref[...])   # (2M, 3H)
    q     = qkv_all[:M, 0:H].reshape(bblk, n, H)
    k_tok = qkv_all[:M, H:2 * H].reshape(bblk, n, H)
    v_tok = qkv_all[:M, 2 * H:3 * H].reshape(bblk, n, H)
    k_ctx = qkv_all[M:, H:2 * H].reshape(bblk, n, H)
    v_ctx = qkv_all[M:, 2 * H:3 * H].reshape(bblk, n, H)

    scale = 1.0 / math.sqrt(H)
    # context scores (batched MXU): (bblk, n_query, n_key)
    s_ctx = jax.lax.dot_general(
        q.astype(jnp.bfloat16), k_ctx.astype(jnp.bfloat16),
        (((2,), (2,)), ((0,), (0,))), preferred_element_type=f32) * scale
    # self score (VPU): (bblk, n, 1)
    s_self = jnp.sum(q * k_tok, axis=-1, keepdims=True) * scale

    ent_mask = mask_ref[:, :, :n]            # per-(b,i) key mask for context keys
    agent_col = mask_ref[:, :, n:n + 1]      # agent mask column
    s_ctx = jnp.where(ent_mask > 0.5, s_ctx, -1e9)

    # --- two-part softmax (self key never masked); avoids a lane-axis concat -------
    m = jnp.maximum(jnp.max(s_ctx, axis=-1, keepdims=True), s_self)
    p_self = jnp.exp(s_self - m)
    p_ctx = jnp.exp(s_ctx - m)
    denom = p_self + jnp.sum(p_ctx, axis=-1, keepdims=True)
    att = (p_self * v_tok +
           jax.lax.dot_general(p_ctx.astype(jnp.bfloat16), v_ctx.astype(jnp.bfloat16),
                               (((2,), (1,)), ((0,), (0,))),
                               preferred_element_type=f32)) / denom
    att = att.reshape(M, H)

    att = _bdot(att, wp[:, :H]) + vec[1:2, :H]        # unify-heads linear

    # --- residual + LN -> FF(H->2H->H) -> residual + LN -----------------------------
    x_ln = _layer_norm(att + h_tok, vec[2:3, :H], vec[3:4, :H])
    ff = jnp.maximum(_bdot(x_ln, wp[:, H:3 * H]) + vec[4:5, :], 0.0)
    ff = _bdot(ff, w_ff2_ref[...]) + vec[5:6, :H]
    y = _layer_norm(ff + x_ln, vec[6:7, :H], vec[7:8, :H])

    # --- output_net ------------------------------------------------------------------
    o = jnp.maximum(_bdot(y, wp[:, 3 * H:4 * H]) + vec[8:9, :H], 0.0)
    logits = _bdot(o, wp[:, 4 * H:]) + vec[9:10, :A]                      # (M, A)

    # --- dead-agent masking: logits[agent_mask==0] = [-1e5,...] with +1e5 at idx 0 ---
    col = jax.lax.broadcasted_iota(jnp.int32, (M, A), 1)
    agent = agent_col.reshape(M, 1)
    empty = jnp.where(col == 0, 100000.0, -100000.0).astype(f32)
    logits = jnp.where(agent > 0.5, logits, empty)

    # --- OneHotCategorical sample via Gumbel-max (noise supplied by the wrapper) -----
    z = logits + gum_ref[...].reshape(M, A)
    zmax = jnp.max(z, axis=-1, keepdims=True)
    first = jnp.min(jnp.where(z == zmax, col, A), axis=-1, keepdims=True)
    action = (col == first).astype(f32)

    # --- single lane-dense store: [action | logits | zero pad] -> 128-wide slab ------
    out_pad = out_ref.shape[2]
    pad = out_pad - 2 * A
    slab = jnp.concatenate([action, logits, jnp.zeros((M, pad), f32)], axis=-1)
    out_ref[...] = slab.reshape(bblk, n, out_pad)


# ----------------------------------------------------------------------------------
# Host-side packing / wrapper
# ----------------------------------------------------------------------------------
def pack_params(params):
    """Pack ~20 parameter tensors into 5 buffers (fewer input DMAs, bf16 weights)."""
    H = params["w_q"].shape[0]
    two_h = 2 * H
    w_embed = jnp.concatenate([params["w_in"], params["w_tok"]], axis=1).astype(jnp.bfloat16)
    w_qkv = jnp.concatenate([params["w_q"], params["w_k"], params["w_v"]], axis=1).astype(jnp.bfloat16)
    w_post = jnp.concatenate([params["w_u"], params["w_f1"], params["w_o1"], params["w_o2"]],
                             axis=1).astype(jnp.bfloat16)
    w_ff2 = params["w_f2"].astype(jnp.bfloat16)

    def row(v):
        v = v.astype(jnp.float32)
        return jnp.pad(v, (0, two_h - v.shape[0]))

    vecs = jnp.stack([
        jnp.concatenate([params["b_in"], params["b_tok"]]).astype(jnp.float32),  # 0: fused bias
        row(params["b_u"]),    # 1
        row(params["g1"]),     # 2
        row(params["be1"]),    # 3
        params["b_f1"].astype(jnp.float32),                                      # 4: (2H)
        row(params["b_f2"]),   # 5
        row(params["g2"]),     # 6
        row(params["be2"]),    # 7
        row(params["b_o1"]),   # 8
        row(params["b_o2"]),   # 9
    ]).astype(jnp.float32)
    return w_embed, w_qkv, w_post, w_ff2, vecs


def build_masks(entity_mask, agent_mask, n):
    """(B, n, n+1): cols 0..n-1 = key mask for the n context tokens of group (b,i),
    col n = agent mask.  Torch's `.repeat(1,n,1,1)` on a 3-D tensor makes group (b,i)
    use entity-mask row (b*n + i) % B, so the per-group permutation is kept."""
    B = entity_mask.shape[0]
    idx = (jnp.arange(B)[:, None] * n + jnp.arange(n)[None, :]) % B          # (B, n)
    ent_perm = entity_mask.astype(jnp.float32)[idx]                          # (B, n, n)
    return jnp.concatenate([ent_perm, agent_mask.astype(jnp.float32)[:, :, None]], axis=-1)


def _pick_bblk(B, n, target_rows=256):
    """Largest divisor of B whose row count Bblk*n stays around `target_rows`."""
    best = 1
    for d in range(1, B + 1):
        if B % d == 0 and d * n <= max(target_rows, n):
            best = d
    return best


def entity_actor_forward(params, embs, entity_mask, agent_mask, sample_key=None, bblk=None):
    """Returns (action, logits) like EntityActor.forward (eval mode)."""
    B, n, in_dim = embs.shape
    H = params["w_q"].shape[0]
    A = params["w_o2"].shape[1]
    out_pad = ((2 * A + 127) // 128) * 128            # lane-dense output width

    if sample_key is None:
        sample_key = jax.random.PRNGKey(0)
    gumbel = jax.random.gumbel(sample_key, (B, n, A), jnp.float32)

    w_embed, w_qkv, w_post, w_ff2, vecs = pack_params(params)
    masks = build_masks(entity_mask, agent_mask, n)
    embs_bf16 = embs.astype(jnp.bfloat16)

    if bblk is None:
        bblk = _pick_bblk(B, n)
    num_blocks = B // bblk

    # Rough cost estimate for the XLA scheduler.
    M_total = B * n
    flops = (2 * M_total * in_dim * 2 * H
             + 2 * (2 * M_total) * H * 3 * H
             + 2 * B * n * n * H * 2
             + 2 * M_total * (H * H + H * 2 * H + 2 * H * H + H * H + H * A))
    transcendentals = M_total * (n + 1)
    bytes_accessed = (embs_bf16.size * 2 + masks.size * 4 + gumbel.size * 4
                      + (w_embed.size + w_qkv.size + w_post.size + w_ff2.size) * 2
                      + vecs.size * 4 + B * n * out_pad * 4)

    grid_spec = pltpu.PrefetchScalarGridSpec(
        num_scalar_prefetch=0,
        grid=(num_blocks,),
        in_specs=[
            pl.BlockSpec((bblk, n, in_dim), lambda b: (b, 0, 0)),   # embs (bf16, per-step)
            pl.BlockSpec((bblk, n, n + 1), lambda b: (b, 0, 0)),    # key/agent masks
            pl.BlockSpec((bblk, n, A), lambda b: (b, 0, 0)),        # gumbel noise
            pl.BlockSpec((in_dim, 2 * H), lambda b: (0, 0)),        # weights: VMEM-resident
            pl.BlockSpec((H, 3 * H), lambda b: (0, 0)),
            pl.BlockSpec((H, 4 * H + A), lambda b: (0, 0)),
            pl.BlockSpec((2 * H, H), lambda b: (0, 0)),
            pl.BlockSpec((NUM_VEC, 2 * H), lambda b: (0, 0)),
        ],
        out_specs=pl.BlockSpec((bblk, n, out_pad), lambda b: (b, 0, 0)),
    )
    out = pl.pallas_call(
        _entity_actor_kernel,
        out_shape=jax.ShapeDtypeStruct((B, n, out_pad), jnp.float32),
        grid_spec=grid_spec,
        compiler_params=pltpu.CompilerParams(dimension_semantics=("parallel",)),
        cost_estimate=pl.CostEstimate(flops=int(flops),
                                      transcendentals=int(transcendentals),
                                      bytes_accessed=int(bytes_accessed)),
    )(embs_bf16, masks, gumbel, w_embed, w_qkv, w_post, w_ff2, vecs)

    return out[..., :A], out[..., A:2 * A]            # action, logits


# ----------------------------------------------------------------------------------
# Faithful pure-JAX reference (full graph, all n+1 tokens) for the logits path.
# ----------------------------------------------------------------------------------
def reference_logits(params, embs, entity_mask, agent_mask):
    B, n, _ = embs.shape
    H = params["w_q"].shape[0]
    A = params["w_o2"].shape[1]
    relu = lambda v: jnp.maximum(v, 0.0)

    x1 = relu(_bdot(embs, params["w_in"]) + params["b_in"])        # input_net
    h_tok = relu(_bdot(embs, params["w_tok"]) + params["b_tok"])   # token_layer

    seq = jnp.concatenate(
        [h_tok[:, :, None, :],
         jnp.broadcast_to(x1[:, None, :, :], (B, n, n, H))], axis=2).reshape(B * n, n + 1, H)

    cat_mask = jnp.concatenate([jnp.ones((B, 1), jnp.float32),
                                entity_mask.astype(jnp.float32)], axis=-1)
    key_mask = jnp.tile(cat_mask, (n, 1))       # (B*n, n+1), group r uses row r % B (torch repeat quirk)

    # TransformerBlock(emb=H, heads=1, eval mode)
    q = _bdot(seq, params["w_q"])
    k = _bdot(seq, params["w_k"])
    v = _bdot(seq, params["w_v"])
    scores = jnp.einsum("gqh,gkh->gqk", q.astype(jnp.bfloat16), k.astype(jnp.bfloat16),
                        preferred_element_type=jnp.float32) * (1.0 / math.sqrt(H))
    scores = jnp.where(key_mask[:, None, :] > 0.5, scores, -1e9)
    # (query-side mask omitted: token 0 - the only row kept below - is never masked)
    attn = jax.nn.softmax(scores, axis=-1)
    att = jnp.einsum("gqk,gkh->gqh", attn.astype(jnp.bfloat16), v.astype(jnp.bfloat16),
                     preferred_element_type=jnp.float32)
    att = _bdot(att, params["w_u"]) + params["b_u"]

    x_ln = _layer_norm(att + seq, params["g1"], params["be1"])
    ff = relu(_bdot(x_ln, params["w_f1"]) + params["b_f1"])
    ff = _bdot(ff, params["w_f2"]) + params["b_f2"]
    y = _layer_norm(ff + x_ln, params["g2"], params["be2"])

    y0 = y.reshape(B, n, n + 1, H)[:, :, 0, :]                     # embs[:, :, 0, :]
    o = relu(_bdot(y0, params["w_o1"]) + params["b_o1"])
    logits = _bdot(o, params["w_o2"]) + params["b_o2"]

    empty = jnp.full((A,), -100000.0, jnp.float32).at[0].set(100000.0)
    return jnp.where(agent_mask[:, :, None] > 0.5, logits, empty)


def init_params(key, in_dim, H, A):
    ks = iter(jax.random.split(key, 32))

    def lin(fan_in, fan_out, bias=True):
        bound = 1.0 / math.sqrt(fan_in)
        w = jax.random.uniform(next(ks), (fan_in, fan_out), jnp.float32, -bound, bound)
        b = (jax.random.uniform(next(ks), (fan_out,), jnp.float32, -bound, bound)
             if bias else None)
        return w, b

    w_in, b_in = lin(in_dim, H)
    w_tok, b_tok = lin(in_dim, H)
    w_q, _ = lin(H, H, bias=False)
    w_k, _ = lin(H, H, bias=False)
    w_v, _ = lin(H, H, bias=False)
    w_u, b_u = lin(H, H)
    w_f1, b_f1 = lin(H, 2 * H)
    w_f2, b_f2 = lin(2 * H, H)
    w_o1, b_o1 = lin(H, H)
    w_o2, b_o2 = lin(H, A)
    return dict(
        w_in=w_in, b_in=b_in, w_tok=w_tok, b_tok=b_tok,
        w_q=w_q, w_k=w_k, w_v=w_v, w_u=w_u, b_u=b_u,
        g1=jnp.ones((H,), jnp.float32), be1=jnp.zeros((H,), jnp.float32),
        w_f1=w_f1, b_f1=b_f1, w_f2=w_f2, b_f2=b_f2,
        g2=jnp.ones((H,), jnp.float32), be2=jnp.zeros((H,), jnp.float32),
        w_o1=w_o1, b_o1=b_o1, w_o2=w_o2, b_o2=b_o2,
    )


if __name__ == "__main__":
    B, n, in_dim, H, A = 2, 4, 16, 32, 8

    root = jax.random.PRNGKey(0)
    k_p, k_x, k_s = jax.random.split(root, 3)
    params = init_params(k_p, in_dim, H, A)

    embs = jax.random.normal(k_x, (B, n, in_dim), jnp.float32)
    entity_mask = jnp.array([[1, 1, 1, 0],
                             [1, 1, 0, 0]], jnp.float32)
    agent_mask = jnp.array([[1, 1, 1, 0],
                            [1, 0, 1, 1]], jnp.float32)

    action, logits = entity_actor_forward(params, embs, entity_mask, agent_mask, sample_key=k_s)
    jax.block_until_ready((action, logits))

    # ---- sanity checks vs. the faithful pure-JAX reference ------------------------
    ref = reference_logits(params, embs, entity_mask, agent_mask)
    assert bool(jnp.allclose(logits, ref, atol=2e-2, rtol=2e-2)), \
        float(jnp.max(jnp.abs(logits - ref)))

    # action is a valid one-hot sample; dead agents (agent_mask == 0) forced to index 0
    assert action.shape == (B, n, A)
    assert bool(jnp.all((action == 0.0) | (action == 1.0)))
    assert bool(jnp.all(jnp.sum(action, axis=-1) == 1.0))
    dead = agent_mask == 0.0
    assert bool(jnp.all(jnp.argmax(action, axis=-1)[dead] == 0))

    print("KERNEL_OK")
</pallas_src>

<mosaic_0001>
module attributes {stable_mosaic.version = 11 : i64} {
  func.func @_entity_actor_kernel(%arg0: i32, %arg1: memref<2x4x16xbf16, #tpu.memory_space<vmem>>, %arg2: memref<2x4x5xf32, #tpu.memory_space<vmem>>, %arg3: memref<2x4x8xf32, #tpu.memory_space<vmem>>, %arg4: memref<16x64xbf16, #tpu.memory_space<vmem>>, %arg5: memref<32x96xbf16, #tpu.memory_space<vmem>>, %arg6: memref<32x136xbf16, #tpu.memory_space<vmem>>, %arg7: memref<64x32xbf16, #tpu.memory_space<vmem>>, %arg8: memref<10x64xf32, #tpu.memory_space<vmem>>, %arg9: memref<2x4x128xf32, #tpu.memory_space<vmem>>) attributes {dimension_semantics = [#tpu.dimension_semantics<parallel>], iteration_bounds = array<i64: 1>, scalar_prefetch = 0 : i64, scratch_operands = 0 : i64, tpu.core_type = #tpu.core_type<tc>, window_params = [{transform_indices = @transform_0, window_bounds = array<i64: 2, 4, 16>}, {transform_indices = @transform_1, window_bounds = array<i64: 2, 4, 5>}, {transform_indices = @transform_2, window_bounds = array<i64: 2, 4, 8>}, {pipeline_mode = #tpu.pipeline_mode<synchronous>, transform_indices = @transform_3, window_bounds = array<i64: 16, 64>}, {pipeline_mode = #tpu.pipeline_mode<synchronous>, transform_indices = @transform_4, window_bounds = array<i64: 32, 96>}, {pipeline_mode = #tpu.pipeline_mode<synchronous>, transform_indices = @transform_5, window_bounds = array<i64: 32, 136>}, {pipeline_mode = #tpu.pipeline_mode<synchronous>, transform_indices = @transform_6, window_bounds = array<i64: 64, 32>}, {pipeline_mode = #tpu.pipeline_mode<synchronous>, transform_indices = @transform_7, window_bounds = array<i64: 10, 64>}, {transform_indices = @transform_8, window_bounds = array<i64: 2, 4, 128>}]} {
    %c0 = arith.constant 0 : index
    %c0_0 = arith.constant 0 : index
    %0 = vector.load %arg8[%c0, %c0_0] : memref<10x64xf32, #tpu.memory_space<vmem>>, vector<10x64xf32>
    %c0_1 = arith.constant 0 : index
    %c0_2 = arith.constant 0 : index
    %1 = vector.load %arg6[%c0_1, %c0_2] : memref<32x136xbf16, #tpu.memory_space<vmem>>, vector<32x136xbf16>
    %c0_3 = arith.constant 0 : index
    %c0_4 = arith.constant 0 : index
    %c0_5 = arith.constant 0 : index
    %2 = vector.load %arg1[%c0_3, %c0_4, %c0_5] : memref<2x4x16xbf16, #tpu.memory_space<vmem>>, vector<2x4x16xbf16>
    %3 = vector.shape_cast %2 : vector<2x4x16xbf16> to vector<8x16xbf16>
    %c0_6 = arith.constant 0 : index
    %c0_7 = arith.constant 0 : index
    %4 = vector.load %arg4[%c0_6, %c0_7] : memref<16x64xbf16, #tpu.memory_space<vmem>>, vector<16x64xbf16>
    %cst = arith.constant dense<0.000000e+00> : vector<8x64xf32>
    %5 = tpu.matmul %3, %4, %cst {dimension_numbers = #tpu.dot_dimension_numbers<[1], [0], [0], [1], [0, 0, 1, 1], [], []>} : vector<8x16xbf16>, vector<16x64xbf16>, vector<8x64xf32> -> vector<8x64xf32>
    %6 = vector.extract_strided_slice %0 {offsets = [0, 0], sizes = [1, 64], strides = [1, 1]} : vector<10x64xf32> to vector<1x64xf32>
    %7 = vector.broadcast %6 : vector<1x64xf32> to vector<8x64xf32>
    %8 = arith.addf %5, %7 : vector<8x64xf32>
    %cst_8 = arith.constant 0.000000e+00 : f32
    %9 = vector.broadcast %cst_8 : f32 to vector<8x64xf32>
    %10 = arith.maximumf %8, %9 : vector<8x64xf32>
    %11 = vector.extract_strided_slice %10 {offsets = [0, 0], sizes = [8, 32], strides = [1, 1]} : vector<8x64xf32> to vector<8x32xf32>
    %12 = vector.extract_strided_slice %10 {offsets = [0, 32], sizes = [8, 32], strides = [1, 1]} : vector<8x64xf32> to vector<8x32xf32>
    %13 = tpu.concatenate %12, %11 in 0 : vector<8x32xf32>, vector<8x32xf32> -> vector<16x32xf32>
    %c0_9 = arith.constant 0 : index
    %c0_10 = arith.constant 0 : index
    %14 = vector.load %arg5[%c0_9, %c0_10] : memref<32x96xbf16, #tpu.memory_space<vmem>>, vector<32x96xbf16>
    %15 = arith.truncf %13 : vector<16x32xf32> to vector<16x32xbf16>
    %cst_11 = arith.constant dense<0.000000e+00> : vector<16x96xf32>
    %16 = tpu.matmul %15, %14, %cst_11 {dimension_numbers = #tpu.dot_dimension_numbers<[1], [0], [0], [1], [0, 0, 1, 1], [], []>} : vector<16x32xbf16>, vector<32x96xbf16>, vector<16x96xf32> -> vector<16x96xf32>
    %17 = vector.extract_strided_slice %16 {offsets = [0, 0], sizes = [8, 32], strides = [1, 1]} : vector<16x96xf32> to vector<8x32xf32>
    %18 = vector.shape_cast %17 : vector<8x32xf32> to vector<2x4x32xf32>
    %19 = vector.extract_strided_slice %16 {offsets = [0, 32], sizes = [8, 32], strides = [1, 1]} : vector<16x96xf32> to vector<8x32xf32>
    %20 = vector.shape_cast %19 : vector<8x32xf32> to vector<2x4x32xf32>
    %21 = vector.extract_strided_slice %16 {offsets = [0, 64], sizes = [8, 32], strides = [1, 1]} : vector<16x96xf32> to vector<8x32xf32>
    %22 = vector.shape_cast %21 : vector<8x32xf32> to vector<2x4x32xf32>
    %23 = vector.extract_strided_slice %16 {offsets = [8, 32], sizes = [8, 32], strides = [1, 1]} : vector<16x96xf32> to vector<8x32xf32>
    %24 = vector.shape_cast %23 : vector<8x32xf32> to vector<2x4x32xf32>
    %25 = vector.extract_strided_slice %16 {offsets = [8, 64], sizes = [8, 32], strides = [1, 1]} : vector<16x96xf32> to vector<8x32xf32>
    %26 = vector.shape_cast %25 : vector<8x32xf32> to vector<2x4x32xf32>
    %27 = arith.truncf %18 : vector<2x4x32xf32> to vector<2x4x32xbf16>
    %28 = arith.truncf %24 : vector<2x4x32xf32> to vector<2x4x32xbf16>
    %cst_12 = arith.constant dense<0.000000e+00> : vector<2x4x4xf32>
    %29 = tpu.matmul %27, %28, %cst_12 {dimension_numbers = #tpu.dot_dimension_numbers<[2], [2], [1], [1], [0, 0, 0, 1, 1, 1], [0], [0]>} : vector<2x4x32xbf16>, vector<2x4x32xbf16>, vector<2x4x4xf32> -> vector<2x4x4xf32>
    %cst_13 = arith.constant 0.176776692 : f32
    %30 = vector.broadcast %cst_13 : f32 to vector<2x4x4xf32>
    %31 = arith.mulf %29, %30 : vector<2x4x4xf32>
    %32 = arith.mulf %18, %20 : vector<2x4x32xf32>
    %cst_14 = arith.constant dense<0.000000e+00> : vector<2x4xf32>
    %33 = vector.multi_reduction <add>, %32, %cst_14 [2] : vector<2x4x32xf32> to vector<2x4xf32>
    %34 = vector.shape_cast %33 : vector<2x4xf32> to vector<2x4x1xf32>
    %cst_15 = arith.constant 0.176776692 : f32
    %35 = vector.broadcast %cst_15 : f32 to vector<2x4x1xf32>
    %36 = arith.mulf %34, %35 : vector<2x4x1xf32>
    %c0_16 = arith.constant 0 : index
    %c0_17 = arith.constant 0 : index
    %c0_18 = arith.constant 0 : index
    %37 = vector.load %arg2[%c0_16, %c0_17, %c0_18] : memref<2x4x5xf32, #tpu.memory_space<vmem>>, vector<2x4x4xf32>
    %c0_19 = arith.constant 0 : index
    %c0_20 = arith.constant 0 : index
    %c4 = arith.constant 4 : index
    %38 = vector.load %arg2[%c0_19, %c0_20, %c4] : memref<2x4x5xf32, #tpu.memory_space<vmem>>, vector<2x4x1xf32>
    %cst_21 = arith.constant 5.000000e-01 : f32
    %39 = vector.broadcast %cst_21 : f32 to vector<2x4x4xf32>
    %40 = arith.cmpf ogt, %37, %39 : vector<2x4x4xf32>
    %cst_22 = arith.constant -1.000000e+09 : f32
    %41 = vector.broadcast %cst_22 : f32 to vector<2x4x4xf32>
    %42 = arith.select %40, %31, %41 : vector<2x4x4xi1>, vector<2x4x4xf32>
    %cst_23 = arith.constant dense<0xFF800000> : vector<2x4xf32>
    %43 = vector.multi_reduction <maximumf>, %42, %cst_23 [2] : vector<2x4x4xf32> to vector<2x4xf32>
    %44 = vector.shape_cast %43 : vector<2x4xf32> to vector<2x4x1xf32>
    %45 = arith.maximumf %44, %36 : vector<2x4x1xf32>
    %46 = arith.subf %36, %45 : vector<2x4x1xf32>
    %47 = math.exp %46 : vector<2x4x1xf32>
    %48 = vector.broadcast %45 : vector<2x4x1xf32> to vector<2x4x4xf32>
    %49 = arith.subf %42, %48 : vector<2x4x4xf32>
    %50 = math.exp %49 : vector<2x4x4xf32>
    %cst_24 = arith.constant dense<0.000000e+00> : vector<2x4xf32>
    %51 = vector.multi_reduction <add>, %50, %cst_24 [2] : vector<2x4x4xf32> to vector<2x4xf32>
    %52 = vector.shape_cast %51 : vector<2x4xf32> to vector<2x4x1xf32>
    %53 = arith.addf %47, %52 : vector<2x4x1xf32>
    %54 = vector.broadcast %47 : vector<2x4x1xf32> to vector<2x4x32xf32>
    %55 = arith.mulf %54, %22 : vector<2x4x32xf32>
    %56 = arith.truncf %50 : vector<2x4x4xf32> to vector<2x4x4xbf16>
    %57 = arith.truncf %26 : vector<2x4x32xf32> to vector<2x4x32xbf16>
    %cst_25 = arith.constant dense<0.000000e+00> : vector<2x4x32xf32>
    %58 = tpu.matmul %56, %57, %cst_25 {dimension_numbers = #tpu.dot_dimension_numbers<[2], [1], [1], [2], [0, 0, 0, 1, 1, 2], [0], [0]>} : vector<2x4x4xbf16>, vector<2x4x32xbf16>, vector<2x4x32xf32> -> vector<2x4x32xf32>
    %59 = arith.addf %55, %58 : vector<2x4x32xf32>
    %60 = vector.broadcast %53 : vector<2x4x1xf32> to vector<2x4x32xf32>
    %61 = arith.divf %59, %60 : vector<2x4x32xf32>
    %62 = vector.shape_cast %61 : vector<2x4x32xf32> to vector<8x32xf32>
    %63 = vector.extract_strided_slice %1 {offsets = [0, 0], sizes = [32, 32], strides = [1, 1]} : vector<32x136xbf16> to vector<32x32xbf16>
    %64 = arith.truncf %62 : vector<8x32xf32> to vector<8x32xbf16>
    %cst_26 = arith.constant dense<0.000000e+00> : vector<8x32xf32>
    %65 = tpu.matmul %64, %63, %cst_26 {dimension_numbers = #tpu.dot_dimension_numbers<[1], [0], [0], [1], [0, 0, 1, 1], [], []>} : vector<8x32xbf16>, vector<32x32xbf16>, vector<8x32xf32> -> vector<8x32xf32>
    %66 = vector.extract_strided_slice %0 {offsets = [1, 0], sizes = [1, 32], strides = [1, 1]} : vector<10x64xf32> to vector<1x32xf32>
    %67 = vector.broadcast %66 : vector<1x32xf32> to vector<8x32xf32>
    %68 = arith.addf %65, %67 : vector<8x32xf32>
    %69 = arith.addf %68, %12 : vector<8x32xf32>
    %70 = vector.extract_strided_slice %0 {offsets = [2, 0], sizes = [1, 32], strides = [1, 1]} : vector<10x64xf32> to vector<1x32xf32>
    %71 = vector.extract_strided_slice %0 {offsets = [3, 0], sizes = [1, 32], strides = [1, 1]} : vector<10x64xf32> to vector<1x32xf32>
    %cst_27 = arith.constant dense<0.000000e+00> : vector<8xf32>
    %72 = vector.multi_reduction <add>, %69, %cst_27 [1] : vector<8x32xf32> to vector<8xf32>
    %73 = vector.shape_cast %72 : vector<8xf32> to vector<8x1xf32>
    %cst_28 = arith.constant 3.200000e+01 : f32
    %74 = vector.broadcast %cst_28 : f32 to vector<8x1xf32>
    %75 = arith.divf %73, %74 : vector<8x1xf32>
    %76 = vector.broadcast %75 : vector<8x1xf32> to vector<8x32xf32>
    %77 = arith.subf %69, %76 : vector<8x32xf32>
    %78 = arith.mulf %77, %77 : vector<8x32xf32>
    %cst_29 = arith.constant dense<0.000000e+00> : vector<8xf32>
    %79 = vector.multi_reduction <add>, %78, %cst_29 [1] : vector<8x32xf32> to vector<8xf32>
    %80 = vector.shape_cast %79 : vector<8xf32> to vector<8x1xf32>
    %cst_30 = arith.constant 3.200000e+01 : f32
    %81 = vector.broadcast %cst_30 : f32 to vector<8x1xf32>
    %82 = arith.divf %80, %81 : vector<8x1xf32>
    %cst_31 = arith.constant 9.99999974E-6 : f32
    %83 = vector.broadcast %cst_31 : f32 to vector<8x1xf32>
    %84 = arith.addf %82, %83 : vector<8x1xf32>
    %85 = math.rsqrt %84 : vector<8x1xf32>
    %86 = vector.broadcast %85 : vector<8x1xf32> to vector<8x32xf32>
    %87 = arith.mulf %77, %86 : vector<8x32xf32>
    %88 = vector.broadcast %70 : vector<1x32xf32> to vector<8x32xf32>
    %89 = arith.mulf %87, %88 : vector<8x32xf32>
    %90 = vector.broadcast %71 : vector<1x32xf32> to vector<8x32xf32>
    %91 = arith.addf %89, %90 : vector<8x32xf32>
    %92 = vector.extract_strided_slice %1 {offsets = [0, 32], sizes = [32, 64], strides = [1, 1]} : vector<32x136xbf16> to vector<32x64xbf16>
    %93 = arith.truncf %91 : vector<8x32xf32> to vector<8x32xbf16>
    %cst_32 = arith.constant dense<0.000000e+00> : vector<8x64xf32>
    %94 = tpu.matmul %93, %92, %cst_32 {dimension_numbers = #tpu.dot_dimension_numbers<[1], [0], [0], [1], [0, 0, 1, 1], [], []>} : vector<8x32xbf16>, vector<32x64xbf16>, vector<8x64xf32> -> vector<8x64xf32>
    %95 = vector.extract_strided_slice %0 {offsets = [4, 0], sizes = [1, 64], strides = [1, 1]} : vector<10x64xf32> to vector<1x64xf32>
    %96 = vector.broadcast %95 : vector<1x64xf32> to vector<8x64xf32>
    %97 = arith.addf %94, %96 : vector<8x64xf32>
    %cst_33 = arith.constant 0.000000e+00 : f32
    %98 = vector.broadcast %cst_33 : f32 to vector<8x64xf32>
    %99 = arith.maximumf %97, %98 : vector<8x64xf32>
    %c0_34 = arith.constant 0 : index
    %c0_35 = arith.constant 0 : index
    %100 = vector.load %arg7[%c0_34, %c0_35] : memref<64x32xbf16, #tpu.memory_space<vmem>>, vector<64x32xbf16>
    %101 = arith.truncf %99 : vector<8x64xf32> to vector<8x64xbf16>
    %cst_36 = arith.constant dense<0.000000e+00> : vector<8x32xf32>
    %102 = tpu.matmul %101, %100, %cst_36 {dimension_numbers = #tpu.dot_dimension_numbers<[1], [0], [0], [1], [0, 0, 1, 1], [], []>} : vector<8x64xbf16>, vector<64x32xbf16>, vector<8x32xf32> -> vector<8x32xf32>
    %103 = vector.extract_strided_slice %0 {offsets = [5, 0], sizes = [1, 32], strides = [1, 1]} : vector<10x64xf32> to vector<1x32xf32>
    %104 = vector.broadcast %103 : vector<1x32xf32> to vector<8x32xf32>
    %105 = arith.addf %102, %104 : vector<8x32xf32>
    %106 = arith.addf %105, %91 : vector<8x32xf32>
    %107 = vector.extract_strided_slice %0 {offsets = [6, 0], sizes = [1, 32], strides = [1, 1]} : vector<10x64xf32> to vector<1x32xf32>
    %108 = vector.extract_strided_slice %0 {offsets = [7, 0], sizes = [1, 32], strides = [1, 1]} : vector<10x64xf32> to vector<1x32xf32>
    %cst_37 = arith.constant dense<0.000000e+00> : vector<8xf32>
    %109 = vector.multi_reduction <add>, %106, %cst_37 [1] : vector<8x32xf32> to vector<8xf32>
    %110 = vector.shape_cast %109 : vector<8xf32> to vector<8x1xf32>
    %cst_38 = arith.constant 3.200000e+01 : f32
    %111 = vector.broadcast %cst_38 : f32 to vector<8x1xf32>
    %112 = arith.divf %110, %111 : vector<8x1xf32>
    %113 = vector.broadcast %112 : vector<8x1xf32> to vector<8x32xf32>
    %114 = arith.subf %106, %113 : vector<8x32xf32>
    %115 = arith.mulf %114, %114 : vector<8x32xf32>
    %cst_39 = arith.constant dense<0.000000e+00> : vector<8xf32>
    %116 = vector.multi_reduction <add>, %115, %cst_39 [1] : vector<8x32xf32> to vector<8xf32>
    %117 = vector.shape_cast %116 : vector<8xf32> to vector<8x1xf32>
    %cst_40 = arith.constant 3.200000e+01 : f32
    %118 = vector.broadcast %cst_40 : f32 to vector<8x1xf32>
    %119 = arith.divf %117, %118 : vector<8x1xf32>
    %cst_41 = arith.constant 9.99999974E-6 : f32
    %120 = vector.broadcast %cst_41 : f32 to vector<8x1xf32>
    %121 = arith.addf %119, %120 : vector<8x1xf32>
    %122 = math.rsqrt %121 : vector<8x1xf32>
    %123 = vector.broadcast %122 : vector<8x1xf32> to vector<8x32xf32>
    %124 = arith.mulf %114, %123 : vector<8x32xf32>
    %125 = vector.broadcast %107 : vector<1x32xf32> to vector<8x32xf32>
    %126 = arith.mulf %124, %125 : vector<8x32xf32>
    %127 = vector.broadcast %108 : vector<1x32xf32> to vector<8x32xf32>
    %128 = arith.addf %126, %127 : vector<8x32xf32>
    %129 = vector.extract_strided_slice %1 {offsets = [0, 96], sizes = [32, 32], strides = [1, 1]} : vector<32x136xbf16> to vector<32x32xbf16>
    %130 = arith.truncf %128 : vector<8x32xf32> to vector<8x32xbf16>
    %cst_42 = arith.constant dense<0.000000e+00> : vector<8x32xf32>
    %131 = tpu.matmul %130, %129, %cst_42 {dimension_numbers = #tpu.dot_dimension_numbers<[1], [0], [0], [1], [0, 0, 1, 1], [], []>} : vector<8x32xbf16>, vector<32x32xbf16>, vector<8x32xf32> -> vector<8x32xf32>
    %132 = vector.extract_strided_slice %0 {offsets = [8, 0], sizes = [1, 32], strides = [1, 1]} : vector<10x64xf32> to vector<1x32xf32>
    %133 = vector.broadcast %132 : vector<1x32xf32> to vector<8x32xf32>
    %134 = arith.addf %131, %133 : vector<8x32xf32>
    %cst_43 = arith.constant 0.000000e+00 : f32
    %135 = vector.broadcast %cst_43 : f32 to vector<8x32xf32>
    %136 = arith.maximumf %134, %135 : vector<8x32xf32>
    %137 = vector.extract_strided_slice %1 {offsets = [0, 128], sizes = [32, 8], strides = [1, 1]} : vector<32x136xbf16> to vector<32x8xbf16>
    %138 = arith.truncf %136 : vector<8x32xf32> to vector<8x32xbf16>
    %cst_44 = arith.constant dense<0.000000e+00> : vector<8x8xf32>
    %139 = tpu.matmul %138, %137, %cst_44 {dimension_numbers = #tpu.dot_dimension_numbers<[1], [0], [0], [1], [0, 0, 1, 1], [], []>} : vector<8x32xbf16>, vector<32x8xbf16>, vector<8x8xf32> -> vector<8x8xf32>
    %140 = vector.extract_strided_slice %0 {offsets = [9, 0], sizes = [1, 8], strides = [1, 1]} : vector<10x64xf32> to vector<1x8xf32>
    %141 = vector.broadcast %140 : vector<1x8xf32> to vector<8x8xf32>
    %142 = arith.addf %139, %141 : vector<8x8xf32>
    %143 = tpu.iota {dimensions = array<i32: 1>} : vector<8x8xi32>
    %144 = vector.shape_cast %38 : vector<2x4x1xf32> to vector<8x1xf32>
    %c0_i32 = arith.constant 0 : i32
    %145 = vector.broadcast %c0_i32 : i32 to vector<8x8xi32>
    %146 = arith.cmpi eq, %143, %145 : vector<8x8xi32>
    %cst_45 = arith.constant 1.000000e+05 : f32
    %cst_46 = arith.constant -1.000000e+05 : f32
    %147 = vector.broadcast %cst_45 : f32 to vector<8x8xf32>
    %148 = vector.broadcast %cst_46 : f32 to vector<8x8xf32>
    %149 = arith.select %146, %147, %148 : vector<8x8xi1>, vector<8x8xf32>
    %cst_47 = arith.constant 5.000000e-01 : f32
    %150 = vector.broadcast %cst_47 : f32 to vector<8x1xf32>
    %151 = arith.cmpf ogt, %144, %150 : vector<8x1xf32>
    %152 = vector.shape_cast %151 : vector<8x1xi1> to vector<8x1xi1>
    %153 = vector.broadcast %152 : vector<8x1xi1> to vector<8x8xi1>
    %154 = arith.select %153, %142, %149 : vector<8x8xi1>, vector<8x8xf32>
    %c0_48 = arith.constant 0 : index
    %c0_49 = arith.constant 0 : index
    %c0_50 = arith.constant 0 : index
    %155 = vector.load %arg3[%c0_48, %c0_49, %c0_50] : memref<2x4x8xf32, #tpu.memory_space<vmem>>, vector<2x4x8xf32>
    %156 = vector.shape_cast %155 : vector<2x4x8xf32> to vector<8x8xf32>
    %157 = arith.addf %154, %156 : vector<8x8xf32>
    %cst_51 = arith.constant dense<0xFF800000> : vector<8xf32>
    %158 = vector.multi_reduction <maximumf>, %157, %cst_51 [1] : vector<8x8xf32> to vector<8xf32>
    %159 = vector.shape_cast %158 : vector<8xf32> to vector<8x1xf32>
    %160 = vector.broadcast %159 : vector<8x1xf32> to vector<8x8xf32>
    %161 = arith.cmpf oeq, %157, %160 : vector<8x8xf32>
    %c8_i32 = arith.constant 8 : i32
    %162 = vector.broadcast %c8_i32 : i32 to vector<8x8xi32>
    %163 = arith.select %161, %143, %162 : vector<8x8xi1>, vector<8x8xi32>
    %cst_52 = arith.constant dense<2147483647> : vector<8xi32>
    %164 = vector.multi_reduction <minsi>, %163, %cst_52 [1] : vector<8x8xi32> to vector<8xi32>
    %165 = vector.shape_cast %164 : vector<8xi32> to vector<8x1xi32>
    %166 = vector.broadcast %165 : vector<8x1xi32> to vector<8x8xi32>
    %167 = arith.cmpi eq, %143, %166 : vector<8x8xi32>
    %168 = arith.extui %167 : vector<8x8xi1> to vector<8x8xi32>
    %169 = arith.sitofp %168 : vector<8x8xi32> to vector<8x8xf32>
    %cst_53 = arith.constant 0.000000e+00 : f32
    %170 = vector.broadcast %cst_53 : f32 to vector<8x112xf32>
    %171 = tpu.concatenate %169, %154, %170 in 1 : vector<8x8xf32>, vector<8x8xf32>, vector<8x112xf32> -> vector<8x128xf32>
    %172 = vector.shape_cast %171 : vector<8x128xf32> to vector<2x4x128xf32>
    %c0_54 = arith.constant 0 : index
    %c0_55 = arith.constant 0 : index
    %c0_56 = arith.constant 0 : index
    %173 = vector.load %arg9[%c0_54, %c0_55, %c0_56] : memref<2x4x128xf32, #tpu.memory_space<vmem>>, vector<2x4x128xf32>
    tpu.vector_store %arg9[%c0_54, %c0_55, %c0_56], %172 {strides = array<i32>} : memref<2x4x128xf32, #tpu.memory_space<vmem>>, vector<2x4x128xf32>,
    return
  }
  func.func @transform_0(%arg0: i32) -> (i32, i32, i32) {
    %c0_i32 = arith.constant 0 : i32
    %c0_i32_0 = arith.constant 0 : i32
    %c0_i32_1 = arith.constant 0 : i32
    return %arg0, %c0_i32, %c0_i32_0 : i32, i32, i32
  }
  func.func @transform_1(%arg0: i32) -> (i32, i32, i32) {
    %c0_i32 = arith.constant 0 : i32
    %c0_i32_0 = arith.constant 0 : i32
    %c0_i32_1 = arith.constant 0 : i32
    return %arg0, %c0_i32, %c0_i32_0 : i32, i32, i32
  }
  func.func @transform_2(%arg0: i32) -> (i32, i32, i32) {
    %c0_i32 = arith.constant 0 : i32
    %c0_i32_0 = arith.constant 0 : i32
    %c0_i32_1 = arith.constant 0 : i32
    return %arg0, %c0_i32, %c0_i32_0 : i32, i32, i32
  }
  func.func @transform_3(%arg0: i32) -> (i32, i32) {
    %c0_i32 = arith.constant 0 : i32
    %c0_i32_0 = arith.constant 0 : i32
    %c0_i32_1 = arith.constant 0 : i32
    return %c0_i32, %c0_i32_0 : i32, i32
  }
  func.func @transform_4(%arg0: i32) -> (i32, i32) {
    %c0_i32 = arith.constant 0 : i32
    %c0_i32_0 = arith.constant 0 : i32
    %c0_i32_1 = arith.constant 0 : i32
    return %c0_i32, %c0_i32_0 : i32, i32
  }
  func.func @transform_5(%arg0: i32) -> (i32, i32) {
    %c0_i32 = arith.constant 0 : i32
    %c0_i32_0 = arith.constant 0 : i32
    %c0_i32_1 = arith.constant 0 : i32
    return %c0_i32, %c0_i32_0 : i32, i32
  }
  func.func @transform_6(%arg0: i32) -> (i32, i32) {
    %c0_i32 = arith.constant 0 : i32
    %c0_i32_0 = arith.constant 0 : i32
    %c0_i32_1 = arith.constant 0 : i32
    return %c0_i32, %c0_i32_0 : i32, i32
  }
  func.func @transform_7(%arg0: i32) -> (i32, i32) {
    %c0_i32 = arith.constant 0 : i32
    %c0_i32_0 = arith.constant 0 : i32
    %c0_i32_1 = arith.constant 0 : i32
    return %c0_i32, %c0_i32_0 : i32, i32
  }
  func.func @transform_8(%arg0: i32) -> (i32, i32, i32) {
    %c0_i32 = arith.constant 0 : i32
    %c0_i32_0 = arith.constant 0 : i32
    %c0_i32_1 = arith.constant 0 : i32
    return %arg0, %c0_i32, %c0_i32_0 : i32, i32, i32
  }
}

</mosaic_0001>

<llo_original>
// kernel: tpu_custom_call.1
$region0: #{tpu_custom_call.1}
  #allocation0 [shape = 'u32[]', space=smem, size = 0x4, offset = 0x4, fixed_abs, tag = 'smem constant byte address 0x4 - core index']
  #allocation1 [shape = 'u32[72,128]{1,0:T(1,128)}', space=vmem, size = 0x9000, scoped, tag = 'internal scratch']
  %s0 = inlined_call_operand.vmem [shape: bf16[2,4,16], index: 0, kind: input, shape index: {}]
  %s1 = inlined_call_operand.hbm [shape: f32[2,4,5], index: 1, kind: input, shape index: {}]
  %s2 = inlined_call_operand.hbm [shape: f32[2,4,8], index: 2, kind: input, shape index: {}]
  %s3 = inlined_call_operand.hbm [shape: bf16[16,64], index: 3, kind: input, shape index: {}]
  %s4 = inlined_call_operand.vmem [shape: bf16[32,96], index: 4, kind: input, shape index: {}]
  %s5 = inlined_call_operand.vmem [shape: bf16[32,136], index: 5, kind: input, shape index: {}]
  %s6 = inlined_call_operand.vmem [shape: bf16[64,32], index: 6, kind: input, shape index: {}]
  %s7 = inlined_call_operand.hbm [shape: f32[10,64], index: 7, kind: input, shape index: {}]
  %s8 = inlined_call_operand.hbm [shape: f32[2,4,128], index: 8, kind: output, shape index: {}]
  %s9 = sld [smem:[#allocation0]]
  $region58: #{tpu_custom_call.1} parent=0
    _
  %s11 = ssub.s32 1, %s9
  %s12 = scalar_select 0, %s11, %s9
  $region1: #{tpu_custom_call.1} parent=0
    #allocation2 [shape = 'u8[4096]{0}', space=vmem, size = 0x1000, scoped, tag = 'input window, operand 1, single buffered']
    #allocation3 [shape = 's32[1]{0}', space=sflag, size = 0x4, scoped, tag = 'scoped memory for tpu_custom_call.1']
    #allocation4 [shape = 's32[1]{0}', space=sflag, size = 0x4, scoped, tag = 'scoped memory for tpu_custom_call.1']
    #allocation5 [shape = 'u8[4096]{0}', space=vmem, size = 0x1000, scoped, tag = 'input window, operand 2, single buffered']
    #allocation6 [shape = 's32[1]{0}', space=sflag, size = 0x4, scoped, tag = 'scoped memory for tpu_custom_call.1']
    #allocation7 [shape = 'u8[4096]{0}', space=vmem, size = 0x1000, scoped, tag = 'input window, operand 3, single buffered']
    #allocation8 [shape = 'u8[8192]{0}', space=vmem, size = 0x2000, scoped, tag = 'input window, operand 7, single buffered']
    #allocation9 [shape = 's32[1]{0}', space=sflag, size = 0x4, scoped, tag = 'scoped memory for tpu_custom_call.1']
    #allocation10 [shape = 'u8[4096]{0}', space=vmem, size = 0x1000, scoped, tag = 'output window, operand 0, single buffered']
    %13 = vsyncpa [#allocation3], 0
    %14 = vsyncpa [#allocation6], 0
    %15 = vsyncpa [#allocation9], 0
    %16 = vsyncpa [#allocation4], 0
    // Predicated region
    $region2: #{tpu_custom_call.1} parent=1 // pred_check
      _
    $region3: #{tpu_custom_call.1} parent=1 // pred_check_branch
      %18 = sbr.rel (0) target = $region5
    $region4: #{tpu_custom_call.1} parent=1 // pred_region
      _
    $region5: #{tpu_custom_call.1} parent=1 // pred_fallthru
      _
    // Predicated region
    $region6: #{tpu_custom_call.1} parent=1 // pred_check
      _
    $region7: #{tpu_custom_call.1} parent=1 // pred_check_branch
      %20 = sbr.rel (0) target = $region9
    $region8: #{tpu_custom_call.1} parent=1 // pred_region
      %22 = vsyncadd [#allocation3], 0
      %s23 = sshll.u32 %s1, 4
      %s24 = int_to_ptr.hbm [resolvable:$true] %s23
      %s25 = sshll.u32 [#allocation2], 4
      %s26 = int_to_ptr.vmem [resolvable:$true] %s25
      %31 = dma.hbm_to_vmem [thread:$0]  %s24, 128, %s26, [#allocation3], 64, 64, 4
    $region9: #{tpu_custom_call.1} parent=1 // pred_fallthru
      _
    // Predicated region
    $region10: #{tpu_custom_call.1} parent=1 // pred_check
      _
    $region11: #{tpu_custom_call.1} parent=1 // pred_check_branch
      %33 = sbr.rel (0) target = $region13
    $region12: #{tpu_custom_call.1} parent=1 // pred_region
      %35 = vsyncadd [#allocation6], 0
      %s36 = sshll.u32 %s2, 4
      %s37 = int_to_ptr.hbm [resolvable:$true] %s36
      %s38 = sshll.u32 [#allocation5], 4
      %s39 = int_to_ptr.vmem [resolvable:$true] %s38
      %44 = dma.hbm_to_vmem [thread:$0]  %s37, 128, %s39, [#allocation6], 64, 64, 4
    $region13: #{tpu_custom_call.1} parent=1 // pred_fallthru
      _
    // Predicated region
    $region14: #{tpu_custom_call.1} parent=1 // pred_check
      _
    $region15: #{tpu_custom_call.1} parent=1 // pred_check_branch
      %46 = sbr.rel (0) target = $region17
    $region16: #{tpu_custom_call.1} parent=1 // pred_region
      %48 = vsyncadd [#allocation6], 0
      %s49 = sshll.u32 %s3, 4
      %s50 = int_to_ptr.hbm [resolvable:$true] %s49
      %s51 = sshll.u32 [#allocation7], 4
      %s52 = int_to_ptr.vmem [resolvable:$true] %s51
      %57 = dma.hbm_to_vmem [thread:$0]  %s50, 128, %s52, [#allocation6], 64, 64, 4
    $region17: #{tpu_custom_call.1} parent=1 // pred_fallthru
      _
    // Predicated region
    $region18: #{tpu_custom_call.1} parent=1 // pred_check
      _
    $region19: #{tpu_custom_call.1} parent=1 // pred_check_branch
      %59 = sbr.rel (0) target = $region21
    $region20: #{tpu_custom_call.1} parent=1 // pred_region
      _
    $region21: #{tpu_custom_call.1} parent=1 // pred_fallthru
      _
    // Predicated region
    $region22: #{tpu_custom_call.1} parent=1 // pred_check
      _
    $region23: #{tpu_custom_call.1} parent=1 // pred_check_branch
      %61 = sbr.rel (0) target = $region25
    $region24: #{tpu_custom_call.1} parent=1 // pred_region
      _
    $region25: #{tpu_custom_call.1} parent=1 // pred_fallthru
      _
    // Predicated region
    $region26: #{tpu_custom_call.1} parent=1 // pred_check
      _
    $region27: #{tpu_custom_call.1} parent=1 // pred_check_branch
      %63 = sbr.rel (0) target = $region29
    $region28: #{tpu_custom_call.1} parent=1 // pred_region
      _
    $region29: #{tpu_custom_call.1} parent=1 // pred_fallthru
      _
    // Predicated region
    $region30: #{tpu_custom_call.1} parent=1 // pred_check
      _
    $region31: #{tpu_custom_call.1} parent=1 // pred_check_branch
      %65 = sbr.rel (0) target = $region33
    $region32: #{tpu_custom_call.1} parent=1 // pred_region
      %67 = vsyncadd [#allocation9], 0
      %s68 = sshll.u32 %s7, 4
      %s69 = int_to_ptr.hbm [resolvable:$true] %s68
      %s70 = sshll.u32 [#allocation8], 4
      %s71 = int_to_ptr.vmem [resolvable:$true] %s70
      %76 = dma.hbm_to_vmem [thread:$0]  %s69, 256, %s71, [#allocation9], 128, 128, 8
    $region33: #{tpu_custom_call.1} parent=1 // pred_fallthru
      _
    // Predicated region
    $region34: #{tpu_custom_call.1} parent=1 // pred_check
      _
    $region35: #{tpu_custom_call.1} parent=1 // pred_check_branch
      %78 = sbr.rel (0) target = $region37
    $region36: #{tpu_custom_call.1} parent=1 // pred_region
      %80 = dma.done [#allocation3], 128
    $region37: #{tpu_custom_call.1} parent=1 // pred_fallthru
      _
    // Predicated region
    $region38: #{tpu_custom_call.1} parent=1 // pred_check
      _
    $region39: #{tpu_custom_call.1} parent=1 // pred_check_branch
      %82 = sbr.rel (0) target = $region41
    $region40: #{tpu_custom_call.1} parent=1 // pred_region
      %84 = dma.done [#allocation6], 128
    $region41: #{tpu_custom_call.1} parent=1 // pred_fallthru
      _
    // Predicated region
    $region42: #{tpu_custom_call.1} parent=1 // pred_check
      _
    $region43: #{tpu_custom_call.1} parent=1 // pred_check_branch
      %86 = sbr.rel (0) target = $region45
    $region44: #{tpu_custom_call.1} parent=1 // pred_region
      %88 = dma.done [#allocation6], 128
    $region45: #{tpu_custom_call.1} parent=1 // pred_fallthru
      _
    // Predicated region
    $region46: #{tpu_custom_call.1} parent=1 // pred_check
      _
    $region47: #{tpu_custom_call.1} parent=1 // pred_check_branch
      %90 = sbr.rel (0) target = $region49
    $region48: #{tpu_custom_call.1} parent=1 // pred_region
      %92 = dma.done [#allocation9], 256
    $region49: #{tpu_custom_call.1} parent=1 // pred_fallthru
      _
    %v94 = vld [vmem:[#allocation8] sm:$0xff]
    %v95 = vld [vmem:[#allocation8 + $0x8] sm:$0x3]
    %v96 = vld [vmem:[%s5] sm:$0xff]
    %v97 = vld [vmem:[%s5 + $0x8] sm:$0xff]
    %v98 = vld [vmem:[%s5 + $0x10] sm:$0xff]
    %v99 = vld [vmem:[%s5 + $0x18] sm:$0xff]
    %v100 = vld [vmem:[%s0] sm:$0x3]
    %v101 = vld [vmem:[%s0 + $0x2] sm:$0x3]
    %v102 = vld [vmem:[#allocation7] sm:$0xf]
    %v103 = vld [vmem:[#allocation7 + $0x4] sm:$0xf]
    %v104 = vperm.slane %v94, 0
    %106 = vst [vmem:[#allocation1] ss:$4 sm:$0xff] %v100
    %s108 = scalar_lea.vmem [#allocation1], 1
    %109 = vst [vmem:[%s108] ss:$4 sm:$0xff] %v101
    %v110 = vld.sshfl [vmem:[#allocation1] sm:$0xff pattern:$0x73625140]
    %v113 = vunpack.c.l.b16 %v102
    %v114 = vunpack.c.l.b16 %v103
    %v115 = vpack.c.b16 %v114, %v113
    %vm117 = vcmask 130048
    %v118 = vsel %vm117, %v110, 0
    %120 = vmatpush.bf16.msra.mxu0 0
    %121 = vmatpush.bf16.msra.mxu0 0
    %122 = vmatpush.bf16.msra.mxu0 0
    %123 = vmatpush.bf16.msra.mxu0 0
    %124 = vmatpush.bf16.msra.mxu0 0
    %125 = vmatpush.bf16.msra.mxu0 0
    %126 = vmatpush.bf16.msra.mxu0 0
    %127 = vmatpush.bf16.msra.mxu0 %v115
    %128 = vmatmul.bf16.gmra.mxu0 %v118
    %v129 = vpop.f32.mrf.mxu0
    %v130 = vadd.f32 %v104, %v129
    %v131 = vpop.f32.mrf.mxu0
    %132 = vdwg.mxu0
    %v133 = vmax.f32 %v130, 0.0
    %135 = vrot.lane.b32.xlu0 %v133, 32
    %v136 = vpop.permute.xlu0 %135
    %v138 = vld [vmem:[%s4] sm:$0xf]
    %v139 = vld [vmem:[%s4 + $0x4] sm:$0xf]
    %v140 = vld [vmem:[%s4 + $0x8] sm:$0xf]
    %v141 = vld [vmem:[%s4 + $0xc] sm:$0xf]
    %v142 = vpack.c.bf16 %v136, %v133
    %144 = vrot.lane.b32.xlu0 %v142, 96
    %v145 = vpop.permute.xlu0 %144
    %v150 = vunpack.c.l.b16 %v138
    %v151 = vunpack.c.l.b16 %v139
    %v152 = vunpack.c.l.b16 %v140
    %v153 = vunpack.c.l.b16 %v141
    %v154 = vpack.c.b16 %v151, %v150
    %v155 = vpack.c.b16 %v153, %v152
    %vm158 = vcmask 261120
    %v160 = vsel %vm158, %v145, 0
    %162 = vmatpush.bf16.msra.mxu0 0
    %163 = vmatpush.bf16.msra.mxu0 0
    %164 = vmatpush.bf16.msra.mxu0 0
    %165 = vmatpush.bf16.msra.mxu0 0
    %166 = vmatpush.bf16.msra.mxu0 0
    %167 = vmatpush.bf16.msra.mxu0 0
    %168 = vmatpush.bf16.msra.mxu0 %v155
    %169 = vmatpush.bf16.msra.mxu0 %v154
    %170 = vmatmul.bf16.gmra.mxu0 %v160
    %v171 = vpop.f32.mrf.mxu0
    %v172 = vadd.f32 0.0, %v171
    %v173 = vpop.f32.mrf.mxu0
    %v174 = vadd.f32 0.0, %v173
    %175 = vdwg.mxu0
    %v177 = vrot.slane %v172, 4
    %v180 = vrot.slane %v174, 4
    %v182 = vpack.c.bf16 %v172, %v172
    %v183 = vpack.c.bf16 %v177, %v177
    %v184 = vpack.c.bf16 %v174, %v174
    %v185 = vpack.c.bf16 %v180, %v180
    %v187 = vunpack.c.l.b16 %v184
    %v188 = vpack.c.b16 %v187, %v187
    %189 = vrot.lane.b32.xlu0 %v188, 96
    %v190 = vpop.permute.xlu0 %189
    %v192 = vsel %vm158, %v182, 0
    %v195 = vsel %vm158, %v190, 0
    %197 = vmatpush.bf16.xpose.msra.mxu0 0
    %198 = vmatpush.bf16.xpose.msra.mxu0 0
    %199 = vmatpush.bf16.xpose.msra.mxu0 0
    %200 = vmatpush.bf16.xpose.msra.mxu0 0
    %201 = vmatpush.bf16.xpose.msra.mxu0 0
    %202 = vmatpush.bf16.xpose.msra.mxu0 0
    %203 = vmatpush.bf16.xpose.msra.mxu0 0
    %204 = vmatpush.bf16.xpose.msra.mxu0 %v195
    %205 = vmatmul.bf16.gmra.mxu0 %v192
    %v206 = vpop.f32.mrf.mxu0
    %v207 = vadd.f32 0.0, %v206
    %v208 = vpop.f32.mrf.mxu0
    %209 = vdwg.mxu0
    %v211 = vunpack.c.l.b16 %v185
    %v212 = vpack.c.b16 %v211, %v211
    %213 = vrot.lane.b32.xlu0 %v212, 96
    %v214 = vpop.permute.xlu0 %213
    %v216 = vsel %vm158, %v183, 0
    %v219 = vsel %vm158, %v214, 0
    %221 = vmatpush.bf16.xpose.msra.mxu0 0
    %222 = vmatpush.bf16.xpose.msra.mxu0 0
    %223 = vmatpush.bf16.xpose.msra.mxu0 0
    %224 = vmatpush.bf16.xpose.msra.mxu0 0
    %225 = vmatpush.bf16.xpose.msra.mxu0 0
    %226 = vmatpush.bf16.xpose.msra.mxu0 0
    %227 = vmatpush.bf16.xpose.msra.mxu0 0
    %228 = vmatpush.bf16.xpose.msra.mxu0 %v219
    %229 = vmatmul.bf16.gmra.mxu0 %v216
    %v230 = vpop.f32.mrf.mxu0
    %v231 = vadd.f32 0.0, %v230
    %v232 = vpop.f32.mrf.mxu0
    %233 = vdwg.mxu0
    %v234 = vmul.f32 %v207, 0.17677669
    %v235 = vmul.f32 %v231, 0.17677669
    %236 = vrot.lane.b32.xlu0 %v172, 96
    %v237 = vpop.permute.xlu0 %236
    %238 = vrot.lane.b32.xlu0 %v177, 96
    %v239 = vpop.permute.xlu0 %238
    %v242 = vmul.f32 %v172, %v237
    %v243 = vmul.f32 %v177, %v239
    %vm244 = vcmask 257024
    %v245 = vsel %vm244, %v242, 0.0
    %246 = vadd.xlane.f32.xlu0 %v245
    %v247 = vpop.xlane.xlu0 %246
    %v248 = vsel %vm244, %v243, 0.0
    %249 = vadd.xlane.f32.xlu0 %v248
    %v250 = vpop.xlane.xlu0 %249
    %v251 = vmul.f32 %v247, 0.17677669
    %v252 = vmul.f32 %v250, 0.17677669
    %v253 = vld [vmem:[#allocation2] sm:$0xf]
    %v254 = vld [vmem:[#allocation2 + $0x4] sm:$0xf]
    %vm255 = vcmp.gt.f32.partialorder %v253, 0.5
    %vm256 = vcmp.gt.f32.partialorder %v254, 0.5
    %v257 = vsel %vm255, %v234, -1e+09
    %v258 = vsel %vm256, %v235, -1e+09
    %vm259 = vcmask 27648
    %v260 = vsel %vm259, %v257, -inf
    %261 = vmax.xlane.f32.xlu0 %v260
    %v262 = vpop.xlane.xlu0 %261
    %v263 = vsel %vm259, %v258, -inf
    %264 = vmax.xlane.f32.xlu0 %v263
    %v265 = vpop.xlane.xlu0 %264
    %v266 = vmax.f32 %v262, %v251
    %v267 = vmax.f32 %v265, %v252
    %v268 = vsub.f32 %v251, %v266
    %v269 = vsub.f32 %v252, %v267
    %v270 = vmul.f32 %v268, 1.442695
    %v271 = vpow.pop %v270
    %v272 = vmul.f32 %v269, 1.442695
    %v273 = vpow.pop %v272
    %v274 = vsub.f32 %v257, %v266
    %v275 = vsub.f32 %v258, %v267
    %v276 = vmul.f32 %v274, 1.442695
    %v277 = vpow.pop %v276
    %v278 = vmul.f32 %v275, 1.442695
    %v279 = vpow.pop %v278
    %v280 = vsel %vm259, %v277, 0.0
    %281 = vadd.xlane.f32.xlu0 %v280
    %v282 = vpop.xlane.xlu0 %281
    %v283 = vsel %vm259, %v279, 0.0
    %284 = vadd.xlane.f32.xlu0 %v283
    %v285 = vpop.xlane.xlu0 %284
    %v286 = vadd.f32 %v271, %v282
    %v287 = vadd.f32 %v273, %v285
    %288 = vst [vmem:[#allocation1] ss:$2 sm:$0xff] %v172
    %v289 = vld.sshfl [vmem:[#allocation1] sm:$0xff pattern:$0x75316420]
    %s290 = scalar_lea.vmem [#allocation1], 16
    %291 = vst [vmem:[%s290] ss:$2 sm:$0xff] %v177
    %v292 = vld.sshfl [vmem:[#allocation1 + $0x10] sm:$0xff pattern:$0x75316420]
    %293 = vrot.lane.b32.xlu0 %v289, 64
    %v294 = vpop.permute.xlu0 %293
    %295 = vrot.lane.b32.xlu0 %v292, 64
    %v296 = vpop.permute.xlu0 %295
    %v299 = vmul.f32 %v271, %v294
    %v300 = vmul.f32 %v273, %v296
    %v301 = vpack.c.bf16 %v277, %v277
    %v302 = vpack.c.bf16 %v279, %v279
    %303 = vrot.lane.b32.xlu0 %v188, 64
    %v304 = vpop.permute.xlu0 %303
    %vm305 = vcmask 31744
    %v307 = vsel %vm305, %v301, 0
    %vm309 = vcmask 1041408
    %v311 = vsel %vm309, %v304, 0
    %313 = vmatpush.bf16.msra.mxu0 0
    %314 = vmatpush.bf16.msra.mxu0 0
    %315 = vmatpush.bf16.msra.mxu0 0
    %316 = vmatpush.bf16.msra.mxu0 0
    %317 = vmatpush.bf16.msra.mxu0 0
    %318 = vmatpush.bf16.msra.mxu0 0
    %319 = vmatpush.bf16.msra.mxu0 0
    %320 = vmatpush.bf16.msra.mxu0 %v311
    %321 = vmatmul.bf16.gmra.mxu0 %v307
    %v322 = vpop.f32.mrf.mxu0
    %v323 = vadd.f32 0.0, %v322
    %v324 = vpop.f32.mrf.mxu0
    %325 = vdwg.mxu0
    %326 = vrot.lane.b32.xlu0 %v212, 64
    %v327 = vpop.permute.xlu0 %326
    %v329 = vsel %vm305, %v302, 0
    %v332 = vsel %vm309, %v327, 0
    %334 = vmatpush.bf16.msra.mxu0 0
    %335 = vmatpush.bf16.msra.mxu0 0
    %336 = vmatpush.bf16.msra.mxu0 0
    %337 = vmatpush.bf16.msra.mxu0 0
    %338 = vmatpush.bf16.msra.mxu0 0
    %339 = vmatpush.bf16.msra.mxu0 0
    %340 = vmatpush.bf16.msra.mxu0 0
    %341 = vmatpush.bf16.msra.mxu0 %v332
    %342 = vmatmul.bf16.gmra.mxu0 %v329
    %v343 = vpop.f32.mrf.mxu0
    %v344 = vadd.f32 0.0, %v343
    %v345 = vpop.f32.mrf.mxu0
    %346 = vdwg.mxu0
    %v347 = vadd.f32 %v299, %v323
    %v348 = vadd.f32 %v300, %v344
    %v349 = vrcp.pop %v286
    %v350 = vmul.f32 %v286, %v349
    %v351 = vsub.f32 1.0, %v350
    %v352 = vmul.f32 %v349, %v351
    %v353 = vadd.f32 %v349, %v352
    %vm354 = vweird.f32 %v286
    %vm355 = vweird.f32 %v349
    %vm356 = vmor %vm354, %vm355
    %v357 = vsel %vm356, %v349, %v353
    %v358 = vand.u32 2147483647, %v286
    %vm359 = vcmp.eq.f32.partialorder %v358, 8.507059e+37
    %v360 = vand.u32 %v286, 2147483648
    %v361 = vor.u32 1.1754944e-38, %v360
    %v362 = vsel %vm359, %v361, %v357
    %v363 = vmul.f32 %v347, %v362
    %v364 = vrcp.pop %v287
    %v365 = vmul.f32 %v287, %v364
    %v366 = vsub.f32 1.0, %v365
    %v367 = vmul.f32 %v364, %v366
    %v368 = vadd.f32 %v364, %v367
    %vm369 = vweird.f32 %v287
    %vm370 = vweird.f32 %v364
    %vm371 = vmor %vm369, %vm370
    %v372 = vsel %vm371, %v364, %v368
    %v373 = vand.u32 2147483647, %v287
    %vm374 = vcmp.eq.f32.partialorder %v373, 8.507059e+37
    %v375 = vand.u32 %v287, 2147483648
    %v376 = vor.u32 1.1754944e-38, %v375
    %v377 = vsel %vm374, %v376, %v372
    %v378 = vmul.f32 %v348, %v377
    %381 = vst [vmem:[#allocation1] ss:$2 sm:$0xff] %v363
    %s382 = scalar_lea.vmem [#allocation1], 1
    %383 = vst [vmem:[%s382] ss:$2 sm:$0xff] %v378
    %v384 = vld.sshfl [vmem:[#allocation1] sm:$0xff pattern:$0x75316420]
    %v386 = vpack.c.bf16 %v384, %v384
    %v387 = vperm.slane %v94, 1
    %v392 = vunpack.c.l.b16 %v96
    %v393 = vunpack.c.l.b16 %v97
    %v394 = vunpack.c.l.b16 %v98
    %v395 = vunpack.c.l.b16 %v99
    %v396 = vpack.c.b16 %v393, %v392
    %v397 = vpack.c.b16 %v395, %v394
    %v401 = vsel %vm158, %v386, 0
    %403 = vmatpush.bf16.msra.mxu0 0
    %404 = vmatpush.bf16.msra.mxu0 0
    %405 = vmatpush.bf16.msra.mxu0 0
    %406 = vmatpush.bf16.msra.mxu0 0
    %407 = vmatpush.bf16.msra.mxu0 0
    %408 = vmatpush.bf16.msra.mxu0 0
    %409 = vmatpush.bf16.msra.mxu0 %v397
    %410 = vmatpush.bf16.msra.mxu0 %v396
    %411 = vmatmul.bf16.gmra.mxu0 %v401
    %v412 = vpop.f32.mrf.mxu0
    %v413 = vadd.f32 %v387, %v412
    %v414 = vpop.f32.mrf.mxu0
    %415 = vdwg.mxu0
    %416 = vrot.lane.b32.xlu0 %v133, 96
    %v417 = vpop.permute.xlu0 %416
    %v419 = vadd.f32 %v413, %v417
    %v420 = vsel %vm158, %v419, 0.0
    %421 = vadd.xlane.f32.xlu0 %v420
    %v422 = vpop.xlane.xlu0 %421
    %v423 = vrcp.pop 32.0
    %v424 = vmul.f32 32.0, %v423
    %v425 = vsub.f32 1.0, %v424
    %v426 = vmul.f32 %v423, %v425
    %v427 = vadd.f32 %v423, %v426
    %vm428 = vweird.f32 %v423
    %v429 = vsel %vm428, %v423, %v427
    %v430 = vmul.f32 %v422, %v429
    %v431 = vsub.f32 %v419, %v430
    %v432 = vmul.f32 %v431, %v431
    %v433 = vsel %vm158, %v432, 0.0
    %434 = vadd.xlane.f32.xlu0 %v433
    %v435 = vpop.xlane.xlu0 %434
    %v436 = vmul.f32 %v435, %v429
    %v437 = vadd.f32 %v436, 1e-05
    %v438 = vrsqrt.pop %v437
    %v439 = vmul.f32 %v438, %v437
    %v440 = vmul.f32 %v439, %v438
    %v441 = vmul.f32 0.5, %v440
    %v442 = vsub.f32 1.5, %v441
    %v443 = vmul.f32 %v438, %v442
    %vm444 = vweird.f32 %v437
    %vm445 = vweird.f32 %v438
    %vm446 = vmor %vm444, %vm445
    %v447 = vsel %vm446, %v438, %v443
    %v448 = vmul.f32 %v431, %v447
    %v449 = vperm.slane %v94, 2
    %v450 = vmul.f32 %v448, %v449
    %v451 = vperm.slane %v94, 3
    %v452 = vadd.f32 %v450, %v451
    %v453 = vpack.c.bf16 %v452, %v452
    %v454 = vperm.slane %v94, 4
    %455 = vrot.lane.b32.xlu0 %v396, 96
    %v456 = vpop.permute.xlu0 %455
    %457 = vrot.lane.b32.xlu0 %v397, 96
    %v458 = vpop.permute.xlu0 %457
    %v462 = vsel %vm158, %v453, 0
    %464 = vmatpush.bf16.msra.mxu0 0
    %465 = vmatpush.bf16.msra.mxu0 0
    %466 = vmatpush.bf16.msra.mxu0 0
    %467 = vmatpush.bf16.msra.mxu0 0
    %468 = vmatpush.bf16.msra.mxu0 0
    %469 = vmatpush.bf16.msra.mxu0 0
    %470 = vmatpush.bf16.msra.mxu0 %v458
    %471 = vmatpush.bf16.msra.mxu0 %v456
    %472 = vmatmul.bf16.gmra.mxu0 %v462
    %v473 = vpop.f32.mrf.mxu0
    %v474 = vadd.f32 %v454, %v473
    %v475 = vpop.f32.mrf.mxu0
    %476 = vdwg.mxu0
    %v477 = vmax.f32 %v474, 0.0
    %v478 = vld [vmem:[%s6] sm:$0xf]
    %v479 = vld [vmem:[%s6 + $0x4] sm:$0xf]
    %v480 = vld [vmem:[%s6 + $0x8] sm:$0xf]
    %v481 = vld [vmem:[%s6 + $0xc] sm:$0xf]
    %v482 = vld [vmem:[%s6 + $0x10] sm:$0xf]
    %v483 = vld [vmem:[%s6 + $0x14] sm:$0xf]
    %v484 = vld [vmem:[%s6 + $0x18] sm:$0xf]
    %v485 = vld [vmem:[%s6 + $0x1c] sm:$0xf]
    %v486 = vpack.c.bf16 %v477, %v477
    %v487 = vperm.slane %v94, 5
    %v496 = vunpack.c.l.b16 %v478
    %v497 = vunpack.c.l.b16 %v479
    %v498 = vunpack.c.l.b16 %v480
    %v499 = vunpack.c.l.b16 %v481
    %v500 = vunpack.c.l.b16 %v482
    %v501 = vunpack.c.l.b16 %v483
    %v502 = vunpack.c.l.b16 %v484
    %v503 = vunpack.c.l.b16 %v485
    %v504 = vpack.c.b16 %v497, %v496
    %v505 = vpack.c.b16 %v499, %v498
    %v506 = vpack.c.b16 %v501, %v500
    %v507 = vpack.c.b16 %v503, %v502
    %vm512 = vcmask 523264
    %v514 = vsel %vm512, %v486, 0
    %516 = vmatpush.bf16.msra.mxu0 0
    %517 = vmatpush.bf16.msra.mxu0 0
    %518 = vmatpush.bf16.msra.mxu0 0
    %519 = vmatpush.bf16.msra.mxu0 0
    %520 = vmatpush.bf16.msra.mxu0 %v507
    %521 = vmatpush.bf16.msra.mxu0 %v506
    %522 = vmatpush.bf16.msra.mxu0 %v505
    %523 = vmatpush.bf16.msra.mxu0 %v504
    %524 = vmatmul.bf16.gmra.mxu0 %v514
    %v525 = vpop.f32.mrf.mxu0
    %v526 = vadd.f32 %v487, %v525
    %v527 = vpop.f32.mrf.mxu0
    %528 = vdwg.mxu0
    %v529 = vadd.f32 %v526, %v452
    %v530 = vsel %vm158, %v529, 0.0
    %531 = vadd.xlane.f32.xlu0 %v530
    %v532 = vpop.xlane.xlu0 %531
    %v533 = vmul.f32 %v532, %v429
    %v534 = vsub.f32 %v529, %v533
    %v535 = vmul.f32 %v534, %v534
    %v536 = vsel %vm158, %v535, 0.0
    %537 = vadd.xlane.f32.xlu0 %v536
    %v538 = vpop.xlane.xlu0 %537
    %v539 = vmul.f32 %v538, %v429
    %v540 = vadd.f32 %v539, 1e-05
    %v541 = vrsqrt.pop %v540
    %v542 = vmul.f32 %v541, %v540
    %v543 = vmul.f32 %v542, %v541
    %v544 = vmul.f32 0.5, %v543
    %v545 = vsub.f32 1.5, %v544
    %v546 = vmul.f32 %v541, %v545
    %vm547 = vweird.f32 %v540
    %vm548 = vweird.f32 %v541
    %vm549 = vmor %vm547, %vm548
    %v550 = vsel %vm549, %v541, %v546
    %v551 = vmul.f32 %v534, %v550
    %v552 = vperm.slane %v94, 6
    %v553 = vmul.f32 %v551, %v552
    %v554 = vperm.slane %v94, 7
    %v555 = vadd.f32 %v553, %v554
    %v556 = vpack.c.bf16 %v555, %v555
    %v557 = vperm.slane %v95, 0
    %558 = vrot.lane.b32.xlu0 %v396, 32
    %v559 = vpop.permute.xlu0 %558
    %560 = vrot.lane.b32.xlu0 %v397, 32
    %v561 = vpop.permute.xlu0 %560
    %v565 = vsel %vm158, %v556, 0
    %567 = vmatpush.bf16.msra.mxu0 0
    %568 = vmatpush.bf16.msra.mxu0 0
    %569 = vmatpush.bf16.msra.mxu0 0
    %570 = vmatpush.bf16.msra.mxu0 0
    %571 = vmatpush.bf16.msra.mxu0 0
    %572 = vmatpush.bf16.msra.mxu0 0
    %573 = vmatpush.bf16.msra.mxu0 %v561
    %574 = vmatpush.bf16.msra.mxu0 %v559
    %575 = vmatmul.bf16.gmra.mxu0 %v565
    %v576 = vpop.f32.mrf.mxu0
    %v577 = vadd.f32 %v557, %v576
    %v578 = vpop.f32.mrf.mxu0
    %579 = vdwg.mxu0
    %v580 = vmax.f32 %v577, 0.0
    %v581 = vpack.c.bf16 %v580, %v580
    %v582 = vperm.slane %v95, 1
    %v583 = vunpack.c.h.b16 %v96
    %v584 = vunpack.c.h.b16 %v97
    %v585 = vunpack.c.h.b16 %v98
    %v586 = vunpack.c.h.b16 %v99
    %v587 = vpack.c.b16 %v584, %v583
    %v588 = vpack.c.b16 %v586, %v585
    %v592 = vsel %vm158, %v581, 0
    %594 = vmatpush.bf16.msra.mxu0 0
    %595 = vmatpush.bf16.msra.mxu0 0
    %596 = vmatpush.bf16.msra.mxu0 0
    %597 = vmatpush.bf16.msra.mxu0 0
    %598 = vmatpush.bf16.msra.mxu0 0
    %599 = vmatpush.bf16.msra.mxu0 0
    %600 = vmatpush.bf16.msra.mxu0 %v588
    %601 = vmatpush.bf16.msra.mxu0 %v587
    %602 = vmatmul.bf16.gmra.mxu0 %v592
    %v603 = vpop.f32.mrf.mxu0
    %v604 = vadd.f32 %v582, %v603
    %v605 = vpop.f32.mrf.mxu0
    %606 = vdwg.mxu0
    %v607 = vlaneseq
    %v608 = vand.u32 %v607, 127
    %vm609 = vcmp.eq.s32.totalorder %v608, 0
    %v610 = vsel %vm609, 100000.0, -100000.0
    %v611 = vsel %vm255, 1, 0
    %v612 = vsel %vm256, 1, 0
    %613 = vset.pattern.permute.xlu0 4
    %614 = vperm.xlu0 %613, %v611
    %v615 = vpop.permute.xlu0 %614
    %v617 = vunpack.c.l.s4 839922192
    %v618 = vunpack.c.0.s8 %v617
    %v619 = vperm.slane %v615, %v618
    %620 = vset.pattern.permute.xlu0 4
    %621 = vperm.xlu0 %620, %v612
    %v622 = vpop.permute.xlu0 %621
    %v624 = vunpack.c.l.s4 839922192
    %v625 = vunpack.c.0.s8 %v624
    %v626 = vperm.slane %v622, %v625
    %vm627 = vcmp.eq.s32.totalorder %v619, 1
    %vm628 = vcmp.eq.s32.totalorder %v626, 1
    %v630 = vrot.slane %v604, 4
    %v633 = vrot.slane %v610, 4
    %v635 = vsel %vm627, %v604, %v610
    %v636 = vsel %vm628, %v630, %v633
    %v637 = vld [vmem:[#allocation5] sm:$0xf]
    %v638 = vld [vmem:[#allocation5 + $0x4] sm:$0xf]
    %v639 = vadd.f32 %v635, %v637
    %v640 = vadd.f32 %v636, %v638
    %643 = vst [vmem:[#allocation1] ss:$2 sm:$0xff] %v639
    %s644 = scalar_lea.vmem [#allocation1], 1
    %645 = vst [vmem:[%s644] ss:$2 sm:$0xff] %v640
    %v646 = vld.sshfl [vmem:[#allocation1] sm:$0xff pattern:$0x75316420]
    %vm648 = vcmask 64512
    %v649 = vsel %vm648, %v646, -inf
    %650 = vmax.xlane.f32.xlu0 %v649
    %v651 = vpop.xlane.xlu0 %650
    %v654 = vunpack.c.l.s4 839922192
    %v655 = vunpack.c.0.s8 %v654
    %v656 = vperm.slane %v651, %v655
    %v658 = vunpack.c.l.s4 1985246804
    %v659 = vunpack.c.0.s8 %v658
    %v660 = vperm.slane %v651, %v659
    %vm663 = vcmp.eq.f32.partialorder %v639, %v656
    %vm664 = vcmp.eq.f32.partialorder %v640, %v660
    %v665 = vrot.slane %v608, 4
    %v666 = vsel %vm663, %v608, 8
    %v667 = vsel %vm664, %v665, 8
    %668 = vst [vmem:[#allocation1] ss:$2 sm:$0xff] %v666
    %s669 = scalar_lea.vmem [#allocation1], 1
    %670 = vst [vmem:[%s669] ss:$2 sm:$0xff] %v667
    %v671 = vld.sshfl [vmem:[#allocation1] sm:$0xff pattern:$0x75316420]
    %v672 = vsel %vm648, %v671, 2147483647
    %v673 = vand.u32 %v672, 65535
    %v674 = vshra.s32 %v672, 16
    %v675 = vcvt.s32.f32 %v673
    %v676 = vcvt.s32.f32 %v674
    %677 = vmin.xlane.f32.xlu0 %v676
    %v678 = vpop.xlane.xlu0 %677
    %vm679 = vcmp.eq.f32.partialorder %v676, %v678
    %v680 = vsel %vm679, %v675, inf
    %681 = vmin.xlane.f32.xlu0 %v680
    %v682 = vpop.xlane.xlu0 %681
    %v683 = vcvt.f32.s32 %v682
    %v684 = vcvt.f32.s32 %v678
    %v685 = vshll.u32 %v684, 16
    %v686 = vadd.s32 %v685, %v683
    %vm687 = vcmp.eq.s32.totalorder %v608, %v686
    %v688 = vsel %vm687, 1, 0
    %v689 = vcvt.s32.f32 %v688
    %692 = vst [vmem:[#allocation1] ss:$2 sm:$0xff] %v635
    %s693 = scalar_lea.vmem [#allocation1], 1
    %694 = vst [vmem:[%s693] ss:$2 sm:$0xff] %v636
    %v695 = vld.sshfl [vmem:[#allocation1] sm:$0xff pattern:$0x75316420]
    %696 = vrot.lane.b32.xlu0 %v695, 8
    %v697 = vpop.permute.xlu0 %696
    %v699 = vsel %vm648, %v689, %v697
    %v700 = vsel %vm117, %v699, 0.0
    %v702 = vrot.slane %v700, 4
    %704 = vst [vmem:[#allocation10] sm:$0xf] %v700
    %705 = vst [vmem:[#allocation10 + $0x4] sm:$0xf] %v702
    // Predicated region
    $region50: #{tpu_custom_call.1} parent=1 // pred_check
      _
    $region51: #{tpu_custom_call.1} parent=1 // pred_check_branch
      %707 = sbr.rel (0) target = $region53
    $region52: #{tpu_custom_call.1} parent=1 // pred_region
      %709 = vsyncadd [#allocation4], 0
      %s710 = sshll.u32 [#allocation10], 4
      %s711 = int_to_ptr.vmem [resolvable:$true] %s710
      %s712 = sshll.u32 %s8, 4
      %s713 = int_to_ptr.hbm [resolvable:$true] %s712
      %718 = dma.vmem_to_hbm [thread:$0]  %s711, 128, %s713, [#allocation4], 64, 64, 4
    $region53: #{tpu_custom_call.1} parent=1 // pred_fallthru
      _
    // Predicated region
    $region54: #{tpu_custom_call.1} parent=1 // pred_check
      _
    $region55: #{tpu_custom_call.1} parent=1 // pred_check_branch
      %720 = sbr.rel (0) target = $region57
    $region56: #{tpu_custom_call.1} parent=1 // pred_region
      %722 = dma.done [#allocation4], 128
    $region57: #{tpu_custom_call.1} parent=1 // pred_fallthru
      _
    %723 = vsyncpa [#allocation3], 1
    %724 = vsyncpa [#allocation6], 1
    %725 = vsyncpa [#allocation9], 1
    %726 = vsyncpa [#allocation4], 1

</llo_original>
